<compile_context>
chip_gen: v5e
topology: v5e:2x2
jax: 0.10.0
libtpu: 0.0.40
codegen_flags: <defaults>
</compile_context>

<pallas_src>
import functools

import jax
import jax.numpy as jnp
from jax.experimental import pallas as pl
from jax.experimental.pallas import tpu as pltpu

HIDDEN = 128     # nn.Linear(input_dims, 128)
LANE = 128       # TPU lane width
SUBLANE = 8      # TPU sublane width


def _round_up(x, m):
    return (x + m - 1) // m * m


def _dqn_kernel(x_ref, w1_ref, b1_ref, w2_ref, b2_ref, o_ref):
    # fc1: MXU matmul with f32 accumulation; bias + ReLU in f32 on the VPU.
    h = jnp.dot(x_ref[...], w1_ref[...], preferred_element_type=jnp.float32)
    h = jnp.maximum(h + b1_ref[...], 0.0)          # b1 is (1, 128), broadcasts over batch
    # fc2: cast hidden to the weight dtype (bf16 on the v6e/v7x path), f32 accumulate.
    out = jnp.dot(h.astype(w2_ref.dtype), w2_ref[...],
                  preferred_element_type=jnp.float32)
    o_ref[...] = (out + b2_ref[...]).astype(o_ref.dtype)   # b2 is (1, 128-padded)


def prepare_params(w1, b1, w2, b2, *, dtype=jnp.float32):
    """One-time lane-dense padding (and optional bf16 cast) of the weights.

    Inputs (pre-transposed vs. PyTorch's (out, in) layout):
      w1: [input_dims, 128], b1: [128], w2: [128, n_actions], b2: [n_actions]
    Returns:
      w1p: [round_up(input_dims,128), 128]   (zero-padded K rows)
      b1p: [1, 128]                           (f32)
      w2p: [128, round_up(n_actions,128)]     (zero-padded N cols)
      b2p: [1, round_up(n_actions,128)]       (f32, zero-padded)
    """
    in_dims, hidden = w1.shape
    n_actions = w2.shape[1]
    in_pad = _round_up(in_dims, LANE)
    out_pad = _round_up(n_actions, LANE)

    w1p = jnp.zeros((in_pad, hidden), dtype).at[:in_dims, :].set(w1.astype(dtype))
    w2p = jnp.zeros((hidden, out_pad), dtype).at[:, :n_actions].set(w2.astype(dtype))
    # Biases stay f32: post-matmul element-wise math in f32 (v5e VPU has no bf16).
    b1p = b1.astype(jnp.float32).reshape(1, hidden)
    b2p = jnp.zeros((1, out_pad), jnp.float32).at[0, :n_actions].set(
        b2.astype(jnp.float32))
    return w1p, b1p, w2p, b2p


@functools.partial(jax.jit, static_argnames=("n_actions", "batch_tile"))
def linear_deep_q_network(state, w1p, b1p, w2p, b2p, *, n_actions, batch_tile=128):
    """Forward pass. state: [B, input_dims]. Returns [B, n_actions] float32."""
    B, in_dims = state.shape
    in_pad, hidden = w1p.shape
    out_pad = w2p.shape[1]

    # Batch tile: multiple of 8 sublanes, capped at batch_tile; pad B up to it.
    tb = min(batch_tile, _round_up(B, SUBLANE))
    b_pad = _round_up(B, tb)
    n_tiles = b_pad // tb

    # Zero-pad state rows/cols and match the weight dtype (bf16 halves state DMA bytes).
    x = jnp.zeros((b_pad, in_pad), w1p.dtype).at[:B, :in_dims].set(
        state.astype(w1p.dtype))

    def _nbytes(a):
        return a.size * a.dtype.itemsize

    cost = pl.CostEstimate(
        flops=2 * b_pad * (in_pad * hidden + hidden * out_pad),
        transcendentals=0,
        bytes_accessed=(_nbytes(x) + _nbytes(w1p) + _nbytes(b1p)
                        + _nbytes(w2p) + _nbytes(b2p) + b_pad * out_pad * 4),
    )

    out_padded = pl.pallas_call(
        _dqn_kernel,
        out_shape=jax.ShapeDtypeStruct((b_pad, out_pad), jnp.float32),
        grid_spec=pltpu.PrefetchScalarGridSpec(
            num_scalar_prefetch=0,
            grid=(n_tiles,),
            in_specs=[
                pl.BlockSpec((tb, in_pad), lambda i: (i, 0)),        # state tile
                pl.BlockSpec((in_pad, hidden), lambda i: (0, 0)),    # w1 (VMEM-resident)
                pl.BlockSpec((1, hidden), lambda i: (0, 0)),         # b1 (VMEM-resident)
                pl.BlockSpec((hidden, out_pad), lambda i: (0, 0)),   # w2 (VMEM-resident)
                pl.BlockSpec((1, out_pad), lambda i: (0, 0)),        # b2 (VMEM-resident)
            ],
            out_specs=pl.BlockSpec((tb, out_pad), lambda i: (i, 0)), # lane-dense output
        ),
        compiler_params=pltpu.CompilerParams(
            dimension_semantics=("parallel",),     # batch tiles shard across v7x's 2 TCs
            vmem_limit_bytes=32 * 1024 * 1024,     # safe for v7x's 64 MiB/TC VMEM
        ),
        cost_estimate=cost,
    )(x, w1p, b1p, w2p, b2p)

    return out_padded[:B, :n_actions]


def init_params(key, input_dims, n_actions):
    """Deterministic init mirroring nn.Linear's U(-1/sqrt(fan_in), 1/sqrt(fan_in))."""
    k1, k2, k3, k4 = jax.random.split(key, 4)
    bound1 = 1.0 / jnp.sqrt(input_dims)
    bound2 = 1.0 / jnp.sqrt(HIDDEN)
    # Stored already transposed relative to PyTorch's (out, in) layout.
    w1 = jax.random.uniform(k1, (input_dims, HIDDEN), jnp.float32, -bound1, bound1)
    b1 = jax.random.uniform(k2, (HIDDEN,), jnp.float32, -bound1, bound1)
    w2 = jax.random.uniform(k3, (HIDDEN, n_actions), jnp.float32, -bound2, bound2)
    b2 = jax.random.uniform(k4, (n_actions,), jnp.float32, -bound2, bound2)
    return w1, b1, w2, b2


# TODO(synk): optimizer (Adam), MSELoss and device placement from the PyTorch module
# are training-side machinery, not part of the forward pass, and are not implemented.

if __name__ == "__main__":
    key = jax.random.PRNGKey(0)
    batch, input_dims, n_actions = 8, 16, 4   # small RL state/action space

    k_x, k_p, k_x2 = jax.random.split(key, 3)
    state = jax.random.normal(k_x, (batch, input_dims), jnp.float32)
    w1, b1, w2, b2 = init_params(k_p, input_dims, n_actions)

    # Pure-JAX reference (same math as the PyTorch forward).
    ref = jnp.maximum(state @ w1 + b1, 0.0) @ w2 + b2

    # f32 path (exact vs. reference).
    params_f32 = prepare_params(w1, b1, w2, b2, dtype=jnp.float32)
    actions = linear_deep_q_network(state, *params_f32, n_actions=n_actions)
    actions = jax.block_until_ready(actions)
    assert actions.shape == (batch, n_actions)
    assert jnp.allclose(actions, ref, atol=1e-5, rtol=1e-5)

    # bf16 weights/activations with f32 accumulation (v6e/v7x fast path).
    params_bf16 = prepare_params(w1, b1, w2, b2, dtype=jnp.bfloat16)
    actions_bf = linear_deep_q_network(state, *params_bf16, n_actions=n_actions)
    actions_bf = jax.block_until_ready(actions_bf)
    assert actions_bf.shape == (batch, n_actions)
    assert jnp.allclose(actions_bf, ref, atol=5e-2, rtol=5e-2)

    # Larger, non-tile-multiple batch exercising the 'parallel' batch grid axis
    # (multiple tiles, double-buffered state/output DMA).
    big_b = 300
    state_big = jax.random.normal(k_x2, (big_b, input_dims), jnp.float32)
    ref_big = jnp.maximum(state_big @ w1 + b1, 0.0) @ w2 + b2
    actions_big = linear_deep_q_network(state_big, *params_f32, n_actions=n_actions)
    actions_big = jax.block_until_ready(actions_big)
    assert actions_big.shape == (big_b, n_actions)
    assert jnp.allclose(actions_big, ref_big, atol=1e-5, rtol=1e-5)

    print("KERNEL_OK")
</pallas_src>

<mosaic_0001>
module attributes {stable_mosaic.version = 11 : i64} {
  func.func @_dqn_kernel(%arg0: i32, %arg1: memref<8x128xf32, #tpu.memory_space<vmem>>, %arg2: memref<128x128xf32, #tpu.memory_space<vmem>>, %arg3: memref<1x128xf32, #tpu.memory_space<vmem>>, %arg4: memref<128x128xf32, #tpu.memory_space<vmem>>, %arg5: memref<1x128xf32, #tpu.memory_space<vmem>>, %arg6: memref<8x128xf32, #tpu.memory_space<vmem>>) attributes {dimension_semantics = [#tpu.dimension_semantics<parallel>], iteration_bounds = array<i64: 1>, scalar_prefetch = 0 : i64, scratch_operands = 0 : i64, tpu.core_type = #tpu.core_type<tc>, window_params = [{transform_indices = @transform_0, window_bounds = array<i64: 8, 128>}, {pipeline_mode = #tpu.pipeline_mode<synchronous>, transform_indices = @transform_1, window_bounds = array<i64: 128, 128>}, {pipeline_mode = #tpu.pipeline_mode<synchronous>, transform_indices = @transform_2, window_bounds = array<i64: 1, 128>}, {pipeline_mode = #tpu.pipeline_mode<synchronous>, transform_indices = @transform_3, window_bounds = array<i64: 128, 128>}, {pipeline_mode = #tpu.pipeline_mode<synchronous>, transform_indices = @transform_4, window_bounds = array<i64: 1, 128>}, {transform_indices = @transform_5, window_bounds = array<i64: 8, 128>}]} {
    %c0 = arith.constant 0 : index
    %c0_0 = arith.constant 0 : index
    %0 = vector.load %arg1[%c0, %c0_0] : memref<8x128xf32, #tpu.memory_space<vmem>>, vector<8x128xf32>
    %c0_1 = arith.constant 0 : index
    %c0_2 = arith.constant 0 : index
    %1 = vector.load %arg2[%c0_1, %c0_2] : memref<128x128xf32, #tpu.memory_space<vmem>>, vector<128x128xf32>
    %cst = arith.constant dense<0.000000e+00> : vector<8x128xf32>
    %2 = tpu.matmul %0, %1, %cst {dimension_numbers = #tpu.dot_dimension_numbers<[1], [0], [0], [1], [0, 0, 1, 1], [], []>} : vector<8x128xf32>, vector<128x128xf32>, vector<8x128xf32> -> vector<8x128xf32>
    %c0_3 = arith.constant 0 : index
    %c0_4 = arith.constant 0 : index
    %3 = vector.load %arg3[%c0_3, %c0_4] : memref<1x128xf32, #tpu.memory_space<vmem>>, vector<1x128xf32>
    %4 = vector.broadcast %3 : vector<1x128xf32> to vector<8x128xf32>
    %5 = arith.addf %2, %4 : vector<8x128xf32>
    %cst_5 = arith.constant 0.000000e+00 : f32
    %6 = vector.broadcast %cst_5 : f32 to vector<8x128xf32>
    %7 = arith.maximumf %5, %6 : vector<8x128xf32>
    %c0_6 = arith.constant 0 : index
    %c0_7 = arith.constant 0 : index
    %8 = vector.load %arg4[%c0_6, %c0_7] : memref<128x128xf32, #tpu.memory_space<vmem>>, vector<128x128xf32>
    %cst_8 = arith.constant dense<0.000000e+00> : vector<8x128xf32>
    %9 = tpu.matmul %7, %8, %cst_8 {dimension_numbers = #tpu.dot_dimension_numbers<[1], [0], [0], [1], [0, 0, 1, 1], [], []>} : vector<8x128xf32>, vector<128x128xf32>, vector<8x128xf32> -> vector<8x128xf32>
    %c0_9 = arith.constant 0 : index
    %c0_10 = arith.constant 0 : index
    %10 = vector.load %arg5[%c0_9, %c0_10] : memref<1x128xf32, #tpu.memory_space<vmem>>, vector<1x128xf32>
    %11 = vector.broadcast %10 : vector<1x128xf32> to vector<8x128xf32>
    %12 = arith.addf %9, %11 : vector<8x128xf32>
    %c0_11 = arith.constant 0 : index
    %c0_12 = arith.constant 0 : index
    %13 = vector.load %arg6[%c0_11, %c0_12] : memref<8x128xf32, #tpu.memory_space<vmem>>, vector<8x128xf32>
    tpu.vector_store %arg6[%c0_11, %c0_12], %12 {strides = array<i32>} : memref<8x128xf32, #tpu.memory_space<vmem>>, vector<8x128xf32>,
    return
  }
  func.func @transform_0(%arg0: i32) -> (i32, i32) {
    %c0_i32 = arith.constant 0 : i32
    %c0_i32_0 = arith.constant 0 : i32
    return %arg0, %c0_i32 : i32, i32
  }
  func.func @transform_1(%arg0: i32) -> (i32, i32) {
    %c0_i32 = arith.constant 0 : i32
    %c0_i32_0 = arith.constant 0 : i32
    %c0_i32_1 = arith.constant 0 : i32
    return %c0_i32, %c0_i32_0 : i32, i32
  }
  func.func @transform_2(%arg0: i32) -> (i32, i32) {
    %c0_i32 = arith.constant 0 : i32
    %c0_i32_0 = arith.constant 0 : i32
    %c0_i32_1 = arith.constant 0 : i32
    return %c0_i32, %c0_i32_0 : i32, i32
  }
  func.func @transform_3(%arg0: i32) -> (i32, i32) {
    %c0_i32 = arith.constant 0 : i32
    %c0_i32_0 = arith.constant 0 : i32
    %c0_i32_1 = arith.constant 0 : i32
    return %c0_i32, %c0_i32_0 : i32, i32
  }
  func.func @transform_4(%arg0: i32) -> (i32, i32) {
    %c0_i32 = arith.constant 0 : i32
    %c0_i32_0 = arith.constant 0 : i32
    %c0_i32_1 = arith.constant 0 : i32
    return %c0_i32, %c0_i32_0 : i32, i32
  }
  func.func @transform_5(%arg0: i32) -> (i32, i32) {
    %c0_i32 = arith.constant 0 : i32
    %c0_i32_0 = arith.constant 0 : i32
    return %arg0, %c0_i32 : i32, i32
  }
}

</mosaic_0001>

<llo_original>
// kernel: linear_deep_q_network.1
$region0: #{linear_deep_q_network.1}
  #allocation0 [shape = 'u32[]', space=smem, size = 0x4, offset = 0x4, fixed_abs, tag = 'smem constant byte address 0x4 - core index']
  #allocation1 [shape = 'u32[72,128]{1,0:T(1,128)}', space=vmem, size = 0x9000, scoped, tag = 'internal scratch']
  %s0 = inlined_call_operand.vmem [shape: f32[8,128], index: 0, kind: input, shape index: {}]
  %s1 = inlined_call_operand.hbm [shape: f32[128,128], index: 1, kind: input, shape index: {}]
  %s2 = inlined_call_operand.vmem [shape: f32[1,128], index: 2, kind: input, shape index: {}]
  %s3 = inlined_call_operand.hbm [shape: f32[128,128], index: 3, kind: input, shape index: {}]
  %s4 = inlined_call_operand.vmem [shape: f32[1,128], index: 4, kind: input, shape index: {}]
  %s5 = inlined_call_operand.vmem [shape: f32[8,128], index: 5, kind: output, shape index: {}]
  %s6 = sld [smem:[#allocation0]]
  $region38: #{linear_deep_q_network.1} parent=0
    _
  %s8 = ssub.s32 1, %s6
  %s9 = scalar_select 0, %s8, %s6
  $region1: #{linear_deep_q_network.1} parent=0
    #allocation2 [shape = 'u8[65536]{0}', space=vmem, size = 0x10000, scoped, tag = 'input window, operand 1, single buffered']
    #allocation3 [shape = 's32[1]{0}', space=sflag, size = 0x4, scoped, tag = 'scoped memory for linear_deep_q_network.1']
    #allocation4 [shape = 'u8[65536]{0}', space=vmem, size = 0x10000, scoped, tag = 'input window, operand 3, single buffered']
    #allocation5 [shape = 's32[1]{0}', space=sflag, size = 0x4, scoped, tag = 'scoped memory for linear_deep_q_network.1']
    %10 = vsyncpa [#allocation3], 0
    %11 = vsyncpa [#allocation5], 0
    // Predicated region
    $region2: #{linear_deep_q_network.1} parent=1 // pred_check
      _
    $region3: #{linear_deep_q_network.1} parent=1 // pred_check_branch
      %13 = sbr.rel (0) target = $region5
    $region4: #{linear_deep_q_network.1} parent=1 // pred_region
      _
    $region5: #{linear_deep_q_network.1} parent=1 // pred_fallthru
      _
    // Predicated region
    $region6: #{linear_deep_q_network.1} parent=1 // pred_check
      _
    $region7: #{linear_deep_q_network.1} parent=1 // pred_check_branch
      %15 = sbr.rel (0) target = $region9
    $region8: #{linear_deep_q_network.1} parent=1 // pred_region
      %17 = vsyncadd [#allocation3], 0
      %s18 = sshll.u32 %s1, 4
      %s19 = int_to_ptr.hbm [resolvable:$true] %s18
      %s20 = sshll.u32 [#allocation2], 4
      %s21 = int_to_ptr.vmem [resolvable:$true] %s20
      %26 = dma.hbm_to_vmem [thread:$0]  %s19, 2048, %s21, [#allocation3], 128, 128, 8
    $region9: #{linear_deep_q_network.1} parent=1 // pred_fallthru
      _
    // Predicated region
    $region10: #{linear_deep_q_network.1} parent=1 // pred_check
      _
    $region11: #{linear_deep_q_network.1} parent=1 // pred_check_branch
      %28 = sbr.rel (0) target = $region13
    $region12: #{linear_deep_q_network.1} parent=1 // pred_region
      _
    $region13: #{linear_deep_q_network.1} parent=1 // pred_fallthru
      _
    // Predicated region
    $region14: #{linear_deep_q_network.1} parent=1 // pred_check
      _
    $region15: #{linear_deep_q_network.1} parent=1 // pred_check_branch
      %30 = sbr.rel (0) target = $region17
    $region16: #{linear_deep_q_network.1} parent=1 // pred_region
      %32 = vsyncadd [#allocation5], 0
      %s33 = sshll.u32 %s3, 4
      %s34 = int_to_ptr.hbm [resolvable:$true] %s33
      %s35 = sshll.u32 [#allocation4], 4
      %s36 = int_to_ptr.vmem [resolvable:$true] %s35
      %41 = dma.hbm_to_vmem [thread:$0]  %s34, 2048, %s36, [#allocation5], 128, 128, 8
    $region17: #{linear_deep_q_network.1} parent=1 // pred_fallthru
      _
    // Predicated region
    $region18: #{linear_deep_q_network.1} parent=1 // pred_check
      _
    $region19: #{linear_deep_q_network.1} parent=1 // pred_check_branch
      %43 = sbr.rel (0) target = $region21
    $region20: #{linear_deep_q_network.1} parent=1 // pred_region
      _
    $region21: #{linear_deep_q_network.1} parent=1 // pred_fallthru
      _
    // Predicated region
    $region22: #{linear_deep_q_network.1} parent=1 // pred_check
      _
    $region23: #{linear_deep_q_network.1} parent=1 // pred_check_branch
      %45 = sbr.rel (0) target = $region25
    $region24: #{linear_deep_q_network.1} parent=1 // pred_region
      %47 = dma.done [#allocation3], 2048
    $region25: #{linear_deep_q_network.1} parent=1 // pred_fallthru
      _
    // Predicated region
    $region26: #{linear_deep_q_network.1} parent=1 // pred_check
      _
    $region27: #{linear_deep_q_network.1} parent=1 // pred_check_branch
      %49 = sbr.rel (0) target = $region29
    $region28: #{linear_deep_q_network.1} parent=1 // pred_region
      %51 = dma.done [#allocation5], 2048
    $region29: #{linear_deep_q_network.1} parent=1 // pred_fallthru
      _
    %v52 = vld [vmem:[%s0] sm:$0xff]
    %v53 = vld [vmem:[#allocation2] sm:$0xff]
    %v54 = vld [vmem:[#allocation2 + $0x8] sm:$0xff]
    %v55 = vld [vmem:[#allocation2 + $0x10] sm:$0xff]
    %v56 = vld [vmem:[#allocation2 + $0x18] sm:$0xff]
    %v57 = vld [vmem:[#allocation2 + $0x20] sm:$0xff]
    %v58 = vld [vmem:[#allocation2 + $0x28] sm:$0xff]
    %v59 = vld [vmem:[#allocation2 + $0x30] sm:$0xff]
    %v60 = vld [vmem:[#allocation2 + $0x38] sm:$0xff]
    %v61 = vld [vmem:[#allocation2 + $0x40] sm:$0xff]
    %v62 = vld [vmem:[#allocation2 + $0x48] sm:$0xff]
    %v63 = vld [vmem:[#allocation2 + $0x50] sm:$0xff]
    %v64 = vld [vmem:[#allocation2 + $0x58] sm:$0xff]
    %v65 = vld [vmem:[#allocation2 + $0x60] sm:$0xff]
    %v66 = vld [vmem:[#allocation2 + $0x68] sm:$0xff]
    %v67 = vld [vmem:[#allocation2 + $0x70] sm:$0xff]
    %v68 = vld [vmem:[#allocation2 + $0x78] sm:$0xff]
    %v69 = vld [vmem:[%s2] sm:$0x1]
    %v71 = vperm.slane %v69, 0
    %73 = vmatpush.msra.mxu0 %v68
    %74 = vmatpush.msra.mxu0 %v67
    %75 = vmatpush.msra.mxu0 %v66
    %76 = vmatpush.msra.mxu0 %v65
    %77 = vmatpush.msra.mxu0 %v64
    %78 = vmatpush.msra.mxu0 %v63
    %79 = vmatpush.msra.mxu0 %v62
    %80 = vmatpush.msra.mxu0 %v61
    %81 = vmatpush.msra.mxu0 %v60
    %82 = vmatpush.msra.mxu0 %v59
    %83 = vmatpush.msra.mxu0 %v58
    %84 = vmatpush.msra.mxu0 %v57
    %85 = vmatpush.msra.mxu0 %v56
    %86 = vmatpush.msra.mxu0 %v55
    %87 = vmatpush.msra.mxu0 %v54
    %88 = vmatpush.msra.mxu0 %v53
    %89 = vmatmul.f32.gmra.mxu0 %v52
    %v90 = vpop.f32.mrf.mxu0
    %v91 = vadd.f32 %v71, %v90
    %92 = vdwg.mxu0
    %v93 = vmax.f32 %v91, 0.0
    %v94 = vld [vmem:[#allocation4] sm:$0xff]
    %v95 = vld [vmem:[#allocation4 + $0x8] sm:$0xff]
    %v96 = vld [vmem:[#allocation4 + $0x10] sm:$0xff]
    %v97 = vld [vmem:[#allocation4 + $0x18] sm:$0xff]
    %v98 = vld [vmem:[#allocation4 + $0x20] sm:$0xff]
    %v99 = vld [vmem:[#allocation4 + $0x28] sm:$0xff]
    %v100 = vld [vmem:[#allocation4 + $0x30] sm:$0xff]
    %v101 = vld [vmem:[#allocation4 + $0x38] sm:$0xff]
    %v102 = vld [vmem:[#allocation4 + $0x40] sm:$0xff]
    %v103 = vld [vmem:[#allocation4 + $0x48] sm:$0xff]
    %v104 = vld [vmem:[#allocation4 + $0x50] sm:$0xff]
    %v105 = vld [vmem:[#allocation4 + $0x58] sm:$0xff]
    %v106 = vld [vmem:[#allocation4 + $0x60] sm:$0xff]
    %v107 = vld [vmem:[#allocation4 + $0x68] sm:$0xff]
    %v108 = vld [vmem:[#allocation4 + $0x70] sm:$0xff]
    %v109 = vld [vmem:[#allocation4 + $0x78] sm:$0xff]
    %v110 = vld [vmem:[%s4] sm:$0x1]
    %v112 = vperm.slane %v110, 0
    %114 = vmatpush.msra.mxu0 %v109
    %115 = vmatpush.msra.mxu0 %v108
    %116 = vmatpush.msra.mxu0 %v107
    %117 = vmatpush.msra.mxu0 %v106
    %118 = vmatpush.msra.mxu0 %v105
    %119 = vmatpush.msra.mxu0 %v104
    %120 = vmatpush.msra.mxu0 %v103
    %121 = vmatpush.msra.mxu0 %v102
    %122 = vmatpush.msra.mxu0 %v101
    %123 = vmatpush.msra.mxu0 %v100
    %124 = vmatpush.msra.mxu0 %v99
    %125 = vmatpush.msra.mxu0 %v98
    %126 = vmatpush.msra.mxu0 %v97
    %127 = vmatpush.msra.mxu0 %v96
    %128 = vmatpush.msra.mxu0 %v95
    %129 = vmatpush.msra.mxu0 %v94
    %130 = vmatmul.f32.gmra.mxu0 %v93
    %v131 = vpop.f32.mrf.mxu0
    %v132 = vadd.f32 %v112, %v131
    %133 = vdwg.mxu0
    %134 = vst [vmem:[%s5] sm:$0xff] %v132
    // Predicated region
    $region30: #{linear_deep_q_network.1} parent=1 // pred_check
      _
    $region31: #{linear_deep_q_network.1} parent=1 // pred_check_branch
      %136 = sbr.rel (0) target = $region33
    $region32: #{linear_deep_q_network.1} parent=1 // pred_region
      _
    $region33: #{linear_deep_q_network.1} parent=1 // pred_fallthru
      _
    // Predicated region
    $region34: #{linear_deep_q_network.1} parent=1 // pred_check
      _
    $region35: #{linear_deep_q_network.1} parent=1 // pred_check_branch
      %138 = sbr.rel (0) target = $region37
    $region36: #{linear_deep_q_network.1} parent=1 // pred_region
      _
    $region37: #{linear_deep_q_network.1} parent=1 // pred_fallthru
      _
    %139 = vsyncpa [#allocation3], 1
    %140 = vsyncpa [#allocation5], 1

</llo_original>
